<compile_context>
chip_gen: v5e
topology: v5e:2x2
jax: 0.10.0
libtpu: 0.0.40
codegen_flags: <defaults>
</compile_context>

<pallas_src>
import functools

import jax
import jax.numpy as jnp
from jax.experimental import pallas as pl
from jax.experimental.pallas import tpu as pltpu


_NUM_CORE_SPLITS = 2  # leading "parallel" grid axis (uses both TCs on v7x)


def _gap_kernel(bidx_ref, f_ref, o_ref, *, tile_n, tiles_per_core, n_valid):
    """Accumulate partial per-batch feature sums for one point tile.

    bidx_ref: (tile_n, 1) int32   batch id per point
    f_ref:    (tile_n, C) float   feature tile
    o_ref:    (B, C)      f32     resident partial-sum block for this split
    """
    p = pl.program_id(0)          # core split
    i = pl.program_id(1)          # tile index within this split

    @pl.when(i == 0)
    def _():
        o_ref[...] = jnp.zeros_like(o_ref)

    num_batches = o_ref.shape[0]

    f = f_ref[...].astype(jnp.float32)                       # (TN, C)
    bidx = bidx_ref[...]                                     # (TN, 1) int32

    # Rows past the real point count (partial last tile / clamped duplicate
    # tiles) are zeroed so garbage (possibly NaN) never reaches the sum.
    row_start = (p * tiles_per_core + i) * tile_n
    row_ids = jax.lax.broadcasted_iota(jnp.int32, (tile_n, 1), 0) + row_start
    f = jnp.where(row_ids < n_valid, f, 0.0)

    # Point-major one-hot membership (TN, B): lane-axis iota vs. the batch-id
    # column -- a pure VPU compare, no XLU transpose per tile.
    onehot = (
        jax.lax.broadcasted_iota(jnp.int32, (tile_n, num_batches), 1) == bidx
    ).astype(jnp.float32)

    # Contract the point axis on the MXU: (B, C) partial sums.
    partial = jax.lax.dot_general(
        onehot, f, (((0,), (0,)), ((), ())),
        preferred_element_type=jnp.float32)

    o_ref[...] += partial


def _pick_tile_n(n, c, num_batches, vmem_budget_bytes=8 * 1024 * 1024):
    # Per-row VMEM per grid step: double-buffered feature + batch-id inputs
    # plus in-kernel one-hot / mask temporaries (all f32).
    bytes_per_row = 4 * (2 * c + 2 + 2 * num_batches)
    tile_n = vmem_budget_bytes // bytes_per_row
    tile_n = max(8, min(int(tile_n), 2048))
    tile_n = min(tile_n, max(8, ((n + 7) // 8) * 8))   # no bigger than input
    return (tile_n // 8) * 8


@functools.partial(jax.jit, static_argnames=("num_batches",))
def minkowski_global_average_pooling(features, batch_index, *, num_batches):
    """features: [N, C]; batch_index: [N] int in [0, num_batches).

    Returns [num_batches, C] per-batch means (matches the torch module).
    num_batches corresponds to max(batch_index)+1 in torch; it must be static
    here.  Batch ids outside [0, num_batches) are silently dropped.
    """
    n, c = features.shape
    tile_n = _pick_tile_n(n, c, num_batches)

    num_tiles = pl.cdiv(n, tile_n)
    tiles_per_core = pl.cdiv(num_tiles, _NUM_CORE_SPLITS)

    bidx2d = batch_index.astype(jnp.int32).reshape(n, 1)

    def tile_index_map(p, i):
        # Clamp so the DMA never walks past the arrays; clamped duplicate
        # tiles are fully masked out by the kernel's row-validity check.
        t = jnp.minimum(p * tiles_per_core + i, num_tiles - 1)
        return (t, 0)

    kernel = functools.partial(
        _gap_kernel, tile_n=tile_n, tiles_per_core=tiles_per_core, n_valid=n)

    partial_sums = pl.pallas_call(
        kernel,
        out_shape=jax.ShapeDtypeStruct(
            (_NUM_CORE_SPLITS, num_batches, c), jnp.float32),
        grid_spec=pltpu.PrefetchScalarGridSpec(
            num_scalar_prefetch=0,
            grid=(_NUM_CORE_SPLITS, tiles_per_core),
            in_specs=[
                pl.BlockSpec((tile_n, 1), tile_index_map),
                pl.BlockSpec((tile_n, c), tile_index_map),
            ],
            out_specs=pl.BlockSpec((None, num_batches, c),
                                   lambda p, i: (p, 0, 0)),
        ),
        compiler_params=pltpu.CompilerParams(
            dimension_semantics=("parallel", "arbitrary"),
            vmem_limit_bytes=32 * 1024 * 1024,
        ),
    )(bidx2d, features)

    # Counts depend only on batch_index: compute once here (no per-tile XLU
    # reduce inside the kernel), then divide the tiny (B, C) result.
    counts = jax.ops.segment_sum(
        jnp.ones((n,), jnp.float32), batch_index.astype(jnp.int32),
        num_segments=num_batches)
    counts = jnp.maximum(counts, 1.0)  # empty-batch guard (torch assumes non-empty)

    sums = jnp.sum(partial_sums, axis=0)     # reduce the two core splits
    return (sums / counts[:, None]).astype(features.dtype)


def _reference(features, batch_index, num_batches):
    outs = []
    for b in range(num_batches):
        sel = features[batch_index == b]
        outs.append(jnp.mean(sel, axis=0, keepdims=True))
    return jnp.concatenate(outs, axis=0)


if __name__ == "__main__":
    key = jax.random.PRNGKey(0)
    k_feat, k_bidx = jax.random.split(key)

    # Small sparse-tensor-like inputs: N points, C channels, B batches.
    N, C, B = 20, 4, 2
    features = jax.random.normal(k_feat, (N, C), dtype=jnp.float32)
    # Random batch ids; force first B points to cover every batch id so each
    # batch is non-empty (matches the torch module's assumption).
    batch_index = jax.random.randint(k_bidx, (N,), 0, B, dtype=jnp.int32)
    batch_index = batch_index.at[:B].set(jnp.arange(B, dtype=jnp.int32))

    out = minkowski_global_average_pooling(features, batch_index, num_batches=B)
    out = jax.block_until_ready(out)

    ref = _reference(features, batch_index, B)
    assert out.shape == (B, C), (out.shape, (B, C))
    assert jnp.allclose(out, ref, atol=1e-5, rtol=1e-5), (out, ref)

    print("KERNEL_OK")
</pallas_src>

<mosaic_0001>
module attributes {stable_mosaic.version = 11 : i64} {
  func.func @_gap_kernel(%arg0: i32, %arg1: i32, %arg2: memref<24x1xi32, #tpu.memory_space<vmem>>, %arg3: memref<24x4xf32, #tpu.memory_space<vmem>>, %arg4: memref<1x2x4xf32, #tpu.memory_space<vmem>>) attributes {dimension_semantics = [#tpu.dimension_semantics<parallel>, #tpu.dimension_semantics<arbitrary>], iteration_bounds = array<i64: 2, 1>, scalar_prefetch = 0 : i64, scratch_operands = 0 : i64, tpu.core_type = #tpu.core_type<tc>, window_params = [{transform_indices = @transform_0, window_bounds = array<i64: 24, 1>}, {transform_indices = @transform_1, window_bounds = array<i64: 24, 4>}, {transform_indices = @transform_2, window_bounds = array<i64: 1, 2, 4>}]} {
    %c0_i32 = arith.constant 0 : i32
    %0 = arith.cmpi eq, %arg1, %c0_i32 : i32
    %1 = arith.extui %0 : i1 to i32
    %c0_i32_0 = arith.constant 0 : i32
    %2 = arith.cmpi ne, %1, %c0_i32_0 : i32
    scf.if %2 {
      %cst_11 = arith.constant 0.000000e+00 : f32
      %29 = vector.broadcast %cst_11 : f32 to vector<2x4xf32>
      %c0_12 = arith.constant 0 : index
      %c0_13 = arith.constant 0 : index
      %c0_14 = arith.constant 0 : index
      %30 = vector.load %arg4[%c0_12, %c0_13, %c0_14] : memref<1x2x4xf32, #tpu.memory_space<vmem>>, vector<1x2x4xf32>
      %31 = vector.shape_cast %30 : vector<1x2x4xf32> to vector<2x4xf32>
      %32 = vector.shape_cast %29 : vector<2x4xf32> to vector<1x2x4xf32>
      tpu.vector_store %arg4[%c0_12, %c0_13, %c0_14], %32 {strides = array<i32>} : memref<1x2x4xf32, #tpu.memory_space<vmem>>, vector<1x2x4xf32>,
    } else {
    }
    %c0 = arith.constant 0 : index
    %c0_1 = arith.constant 0 : index
    %3 = vector.load %arg3[%c0, %c0_1] : memref<24x4xf32, #tpu.memory_space<vmem>>, vector<24x4xf32>
    %c0_2 = arith.constant 0 : index
    %c0_3 = arith.constant 0 : index
    %4 = vector.load %arg2[%c0_2, %c0_3] : memref<24x1xi32, #tpu.memory_space<vmem>>, vector<24x1xi32>
    %c1_i32 = arith.constant 1 : i32
    %5 = arith.muli %arg0, %c1_i32 : i32
    %6 = arith.addi %5, %arg1 : i32
    %c24_i32 = arith.constant 24 : i32
    %7 = arith.muli %6, %c24_i32 : i32
    %8 = tpu.iota {dimensions = array<i32: 0>} : vector<24x1xi32>
    %9 = vector.broadcast %7 : i32 to vector<24x1xi32>
    %10 = arith.addi %8, %9 : vector<24x1xi32>
    %c20_i32 = arith.constant 20 : i32
    %11 = vector.broadcast %c20_i32 : i32 to vector<24x1xi32>
    %12 = arith.cmpi slt, %10, %11 : vector<24x1xi32>
    %cst = arith.constant 0.000000e+00 : f32
    %13 = vector.shape_cast %12 : vector<24x1xi1> to vector<24x1xi1>
    %14 = vector.broadcast %13 : vector<24x1xi1> to vector<24x4xi1>
    %15 = vector.broadcast %cst : f32 to vector<24x4xf32>
    %16 = arith.select %14, %3, %15 : vector<24x4xi1>, vector<24x4xf32>
    %17 = tpu.iota {dimensions = array<i32: 1>} : vector<24x2xi32>
    %18 = vector.broadcast %4 : vector<24x1xi32> to vector<24x2xi32>
    %19 = arith.cmpi eq, %17, %18 : vector<24x2xi32>
    %20 = arith.extui %19 : vector<24x2xi1> to vector<24x2xi32>
    %21 = arith.sitofp %20 : vector<24x2xi32> to vector<24x2xf32>
    %cst_4 = arith.constant dense<0.000000e+00> : vector<2x4xf32>
    %22 = tpu.matmul %21, %16, %cst_4 {dimension_numbers = #tpu.dot_dimension_numbers<[0], [0], [1], [1], [0, 1, 1, 1], [], []>} : vector<24x2xf32>, vector<24x4xf32>, vector<2x4xf32> -> vector<2x4xf32>
    %c0_5 = arith.constant 0 : index
    %c0_6 = arith.constant 0 : index
    %c0_7 = arith.constant 0 : index
    %23 = vector.load %arg4[%c0_5, %c0_6, %c0_7] : memref<1x2x4xf32, #tpu.memory_space<vmem>>, vector<1x2x4xf32>
    %24 = vector.shape_cast %23 : vector<1x2x4xf32> to vector<2x4xf32>
    %25 = arith.addf %24, %22 : vector<2x4xf32>
    %c0_8 = arith.constant 0 : index
    %c0_9 = arith.constant 0 : index
    %c0_10 = arith.constant 0 : index
    %26 = vector.load %arg4[%c0_8, %c0_9, %c0_10] : memref<1x2x4xf32, #tpu.memory_space<vmem>>, vector<1x2x4xf32>
    %27 = vector.shape_cast %26 : vector<1x2x4xf32> to vector<2x4xf32>
    %28 = vector.shape_cast %25 : vector<2x4xf32> to vector<1x2x4xf32>
    tpu.vector_store %arg4[%c0_8, %c0_9, %c0_10], %28 {strides = array<i32>} : memref<1x2x4xf32, #tpu.memory_space<vmem>>, vector<1x2x4xf32>,
    return
  }
  func.func @transform_0(%arg0: i32, %arg1: i32) -> (i32, i32) {
    %c1_i32 = arith.constant 1 : i32
    %0 = arith.muli %arg0, %c1_i32 : i32
    %1 = arith.addi %0, %arg1 : i32
    %c0_i32 = arith.constant 0 : i32
    %2 = arith.minsi %1, %c0_i32 : i32
    %c0_i32_0 = arith.constant 0 : i32
    %c0_i32_1 = arith.constant 0 : i32
    return %2, %c0_i32_0 : i32, i32
  }
  func.func @transform_1(%arg0: i32, %arg1: i32) -> (i32, i32) {
    %c1_i32 = arith.constant 1 : i32
    %0 = arith.muli %arg0, %c1_i32 : i32
    %1 = arith.addi %0, %arg1 : i32
    %c0_i32 = arith.constant 0 : i32
    %2 = arith.minsi %1, %c0_i32 : i32
    %c0_i32_0 = arith.constant 0 : i32
    %c0_i32_1 = arith.constant 0 : i32
    return %2, %c0_i32_0 : i32, i32
  }
  func.func @transform_2(%arg0: i32, %arg1: i32) -> (i32, i32, i32) {
    %c0_i32 = arith.constant 0 : i32
    %c0_i32_0 = arith.constant 0 : i32
    %c0_i32_1 = arith.constant 0 : i32
    return %arg0, %c0_i32, %c0_i32_0 : i32, i32, i32
  }
}

</mosaic_0001>

<llo_original>
// kernel: minkowski_global_average_pooling.1
$region0: #{minkowski_global_average_pooling.1}
  #allocation0 [shape = 'u32[]', space=smem, size = 0x4, offset = 0x4, fixed_abs, tag = 'smem constant byte address 0x4 - core index']
  #allocation1 [shape = 'u32[72,128]{1,0:T(1,128)}', space=vmem, size = 0x9000, scoped, tag = 'internal scratch']
  %s0 = inlined_call_operand.vmem [shape: s32[20,1], index: 0, kind: input, shape index: {}]
  %s1 = inlined_call_operand.vmem [shape: f32[20,4], index: 1, kind: input, shape index: {}]
  %s2 = inlined_call_operand.vmem [shape: f32[2,2,4], index: 2, kind: output, shape index: {}]
  %s3 = sld [smem:[#allocation0]]
  $region45: #{minkowski_global_average_pooling.1} parent=0
    _
  %s5 = ssub.s32 1, %s3
  %s6 = scalar_select 0, %s5, %s3
  loop: start=0, step=1, limit=4
  $region2: #{minkowski_global_average_pooling.1} parent=0 // loop_pre_header
    _
  $region3: #{minkowski_global_average_pooling.1} parent=0 // loop_header
    %s8 = sphi 0, %s12
    %p9 = scmp.ge.s32.totalorder %s8, 4
    %s15 = sphi 0, %s27
    %s16 = sphi 0, %s23
    %s17 = sphi 0, %s15
    %s18 = sphi 0, %s16
    %s19 = sphi 0, %s17
    %s20 = sphi 0, %s18
    %s36 = sphi 0, %s38
    %s39 = sphi 0, %s36
    %s40 = sphi 0, %s39
    %s56 = sphi 0, %s40
    %s68 = sphi 0, %s70
    %s71 = sphi 0, %s68
    %s72 = sphi 0, %s71
    %s88 = sphi 0, %s72
    %s94 = sphi 0, %s96
    %s97 = sphi 0, %s94
    %s98 = sphi 0, %s97
    %s114 = sphi 0, %s98
  $region4: #{minkowski_global_average_pooling.1} parent=0 // loop_header_branch
    %11 = sbr.rel (%p9) target = $region8
  $region5: #{minkowski_global_average_pooling.1} parent=0 // loop_body
    %s13 = ssub.s32 %s8, 1
    %s14 = ssub.s32 %s8, 2
    %s21 = sadd.s32 1, %s16
    %p22 = scmp.ge.s32.totalorder %s21, 1
    %s23 = scalar_select %p22, 0, %s21
    %s24 = sadd.s32 1, %s15
    %s25 = scalar_select %p22, %s24, %s15
    %p26 = scmp.ge.s32.totalorder %s25, 2
    %s27 = scalar_select %p26, 0, %s25
    %s28 = sadd.s32 %s15, %s16
    %p29 = scmp.lt.s32.totalorder %s28, 0
    %s30 = scalar_select %p29, %s28, 0
    %s31 = sadd.s32 %s27, %s23
    %p32 = scmp.lt.s32.totalorder %s31, 0
    %s33 = scalar_select %p32, %s31, 0
    %s34 = ssub.s32 %s30, %s33
    %p35 = scmp.eq.s32.totalorder %s34, 0
    %s37 = sadd.s32 %s36, 1
    %s38 = scalar_select %p35, %s36, %s37
    %p41 = pneg %p35
    %p42 = scmp.eq.s32.totalorder %s8, 1
    %p43 = por %p41, %p42
    %p44 = scmp.ne.s32.totalorder %s36, %s39
    %p45 = scmp.eq.s32.totalorder %s8, 0
    %p46 = por %p44, %p45
    %p47 = scmp.ne.s32.totalorder %s36, %s39
    %p48 = scmp.eq.s32.totalorder %s13, 1
    %p49 = por %p47, %p48
    %p50 = scmp.ne.s32.totalorder %s39, %s40
    %p51 = scmp.eq.s32.totalorder %s13, 0
    %p52 = por %p50, %p51
    %p53 = scmp.ne.s32.totalorder %s39, %s40
    %p54 = scmp.eq.s32.totalorder %s14, 1
    %p55 = por %p53, %p54
    %p57 = scmp.ne.s32.totalorder %s40, %s56
    %p58 = scmp.eq.s32.totalorder %s14, 0
    %p59 = por %p57, %p58
    %s60 = sadd.s32 %s15, %s16
    %p61 = scmp.lt.s32.totalorder %s60, 0
    %s62 = scalar_select %p61, %s60, 0
    %s63 = sadd.s32 %s27, %s23
    %p64 = scmp.lt.s32.totalorder %s63, 0
    %s65 = scalar_select %p64, %s63, 0
    %s66 = ssub.s32 %s62, %s65
    %p67 = scmp.eq.s32.totalorder %s66, 0
    %s69 = sadd.s32 %s68, 1
    %s70 = scalar_select %p67, %s68, %s69
    %p73 = pneg %p67
    %p74 = scmp.eq.s32.totalorder %s8, 1
    %p75 = por %p73, %p74
    %p76 = scmp.ne.s32.totalorder %s68, %s71
    %p77 = scmp.eq.s32.totalorder %s8, 0
    %p78 = por %p76, %p77
    %p79 = scmp.ne.s32.totalorder %s68, %s71
    %p80 = scmp.eq.s32.totalorder %s13, 1
    %p81 = por %p79, %p80
    %p82 = scmp.ne.s32.totalorder %s71, %s72
    %p83 = scmp.eq.s32.totalorder %s13, 0
    %p84 = por %p82, %p83
    %p85 = scmp.ne.s32.totalorder %s71, %s72
    %p86 = scmp.eq.s32.totalorder %s14, 1
    %p87 = por %p85, %p86
    %p89 = scmp.ne.s32.totalorder %s72, %s88
    %p90 = scmp.eq.s32.totalorder %s14, 0
    %p91 = por %p89, %p90
    %s92 = ssub.s32 %s15, %s27
    %p93 = scmp.eq.s32.totalorder %s92, 0
    %s95 = sadd.s32 %s94, 1
    %s96 = scalar_select %p93, %s94, %s95
    %p99 = pneg %p93
    %p100 = scmp.eq.s32.totalorder %s8, 1
    %p101 = por %p99, %p100
    %p102 = scmp.ne.s32.totalorder %s94, %s97
    %p103 = scmp.eq.s32.totalorder %s8, 0
    %p104 = por %p102, %p103
    %p105 = scmp.ne.s32.totalorder %s94, %s97
    %p106 = scmp.eq.s32.totalorder %s13, 1
    %p107 = por %p105, %p106
    %p108 = scmp.ne.s32.totalorder %s97, %s98
    %p109 = scmp.eq.s32.totalorder %s13, 0
    %p110 = por %p108, %p109
    %p111 = scmp.ne.s32.totalorder %s97, %s98
    %p112 = scmp.eq.s32.totalorder %s14, 1
    %p113 = por %p111, %p112
    %p115 = scmp.ne.s32.totalorder %s98, %s114
    %p116 = scmp.eq.s32.totalorder %s14, 0
    %p117 = por %p115, %p116
    %p118 = scmp.le.s32.totalorder 1, %s8
    %p119 = scmp.lt.s32.totalorder %s8, 3
    %p120 = pnand %p118, %p119
    %p121 = pneg %p120
    // Predicated region
    $region9: #{minkowski_global_average_pooling.1} parent=5 // pred_check
      _
    $region10: #{minkowski_global_average_pooling.1} parent=5 // pred_check_branch
      %123 = sbr.rel (%p120) target = $region12
    $region11: #{minkowski_global_average_pooling.1} parent=5 // pred_region
      %s124 = ssub.s32 %s8, 1
    $region12: #{minkowski_global_average_pooling.1} parent=5 // pred_fallthru
      _
    %p125 = scmp.lt.s32.totalorder %s8, 2
    // Predicated region
    $region13: #{minkowski_global_average_pooling.1} parent=5 // pred_check
      %p126 = pneg %p125
    $region14: #{minkowski_global_average_pooling.1} parent=5 // pred_check_branch
      %128 = sbr.rel (%p126) target = $region16
    $region15: #{minkowski_global_average_pooling.1} parent=5 // pred_region
      // Predicated region
      $region17: #{minkowski_global_average_pooling.1} parent=15 // pred_check
        %p129 = pneg %p46
      $region18: #{minkowski_global_average_pooling.1} parent=15 // pred_check_branch
        %131 = sbr.rel (%p129) target = $region20
      $region19: #{minkowski_global_average_pooling.1} parent=15 // pred_region
        %s132 = sadd.s32 %s15, %s16
        %p133 = scmp.lt.s32.totalorder %s132, 0
        %s134 = scalar_select %p133, %s132, 0
        %s135 = smul.u32 3, %s134
        %p136 = scmp.lt.s32.totalorder %s135, 2
        %s137 = scalar_select %p136, %s135, 2
        %s138 = smul.addr %s137, 8
        %s139 = scalar_lea.vmem %s0, %s138
        %s140 = sadd.s32 %s15, %s16
        %p141 = scmp.lt.s32.totalorder %s140, 0
        %s142 = scalar_select %p141, %s140, 0
        %s143 = smul.u32 3, %s142
      $region20: #{minkowski_global_average_pooling.1} parent=15 // pred_fallthru
        _
      // Predicated region
      $region21: #{minkowski_global_average_pooling.1} parent=15 // pred_check
        %p144 = pneg %p78
      $region22: #{minkowski_global_average_pooling.1} parent=15 // pred_check_branch
        %146 = sbr.rel (%p144) target = $region24
      $region23: #{minkowski_global_average_pooling.1} parent=15 // pred_region
        %s147 = sadd.s32 %s15, %s16
        %p148 = scmp.lt.s32.totalorder %s147, 0
        %s149 = scalar_select %p148, %s147, 0
        %s150 = smul.u32 3, %s149
        %p151 = scmp.lt.s32.totalorder %s150, 2
        %s152 = scalar_select %p151, %s150, 2
        %s153 = smul.addr %s152, 8
        %s154 = scalar_lea.vmem %s1, %s153
        %s155 = sadd.s32 %s15, %s16
        %p156 = scmp.lt.s32.totalorder %s155, 0
        %s157 = scalar_select %p156, %s155, 0
        %s158 = smul.u32 3, %s157
      $region24: #{minkowski_global_average_pooling.1} parent=15 // pred_fallthru
        _
    $region16: #{minkowski_global_average_pooling.1} parent=5 // pred_fallthru
      _
    %p159 = scmp.le.s32.totalorder 1, %s8
    %p160 = scmp.lt.s32.totalorder %s8, 3
    %p161 = pnand %p159, %p160
    %p162 = pneg %p161
    // Predicated region
    $region25: #{minkowski_global_average_pooling.1} parent=5 // pred_check
      _
    $region26: #{minkowski_global_average_pooling.1} parent=5 // pred_check_branch
      %164 = sbr.rel (%p161) target = $region28
    $region27: #{minkowski_global_average_pooling.1} parent=5 // pred_region
      %s165 = ssub.s32 %s8, 1
      %s166 = sadd.s32 %s17, %s18
      %p167 = scmp.lt.s32.totalorder %s166, 0
      %s168 = scalar_select %p167, %s166, 0
      %s169 = smul.u32 3, %s168
      %p170 = scmp.lt.s32.totalorder %s169, 2
      %s171 = scalar_select %p170, %s169, 2
      %s172 = smul.addr %s171, 8
      %s173 = scalar_lea.vmem %s0, %s172
      %p174 = pneg %p52
      %p175 = pneg %p49
      %s176 = sadd.s32 %s17, %s18
      %p177 = scmp.lt.s32.totalorder %s176, 0
      %s178 = scalar_select %p177, %s176, 0
      %s179 = smul.u32 3, %s178
      %p180 = scmp.lt.s32.totalorder %s179, 2
      %s181 = scalar_select %p180, %s179, 2
      %s182 = smul.addr %s181, 8
      %s183 = scalar_lea.vmem %s1, %s182
      %p184 = pneg %p84
      %p185 = pneg %p81
      %p186 = pneg %p110
      %p187 = pneg %p107
      %p188 = scmp.lt.s32.totalorder %s17, 1
      %s189 = scalar_select %p188, %s17, 1
      %s190 = smul.addr %s189, 2
      %s191 = scalar_lea.vmem %s2, %s190
      %s192 = sadd.s32 %s17, %s18
      %p193 = scmp.lt.s32.totalorder %s192, 0
      %s194 = scalar_select %p193, %s192, 0
      %s195 = smul.u32 3, %s194
      %p196 = scmp.lt.s32.totalorder %s195, 2
      %s197 = scalar_select %p196, %s195, 2
      %s198 = smul.addr %s197, 8
      %s199 = scalar_lea.vmem %s0, %s198
      %s200 = sadd.s32 %s17, %s18
      %p201 = scmp.lt.s32.totalorder %s200, 0
      %s202 = scalar_select %p201, %s200, 0
      %s203 = smul.u32 3, %s202
      %s204 = sadd.s32 %s17, %s18
      %p205 = scmp.lt.s32.totalorder %s204, 0
      %s206 = scalar_select %p205, %s204, 0
      %s207 = smul.u32 3, %s206
      %p208 = scmp.lt.s32.totalorder %s207, 2
      %s209 = scalar_select %p208, %s207, 2
      %s210 = smul.addr %s209, 8
      %s211 = scalar_lea.vmem %s1, %s210
      %s212 = sadd.s32 %s17, %s18
      %p213 = scmp.lt.s32.totalorder %s212, 0
      %s214 = scalar_select %p213, %s212, 0
      %s215 = smul.u32 3, %s214
      %p216 = scmp.lt.s32.totalorder %s17, 1
      %s217 = scalar_select %p216, %s17, 1
      %s218 = smul.addr %s217, 2
      %s219 = scalar_lea.vmem %s2, %s218
      %p220 = scmp.eq.s32.totalorder %s18, 0
      // Predicated region
      $region29: #{minkowski_global_average_pooling.1} parent=27 // pred_check
        %p221 = pneg %p220
      $region30: #{minkowski_global_average_pooling.1} parent=27 // pred_check_branch
        %223 = sbr.rel (%p221) target = $region32
      $region31: #{minkowski_global_average_pooling.1} parent=27 // pred_region
        %vm224 = vcmask 25600
        %225 = vst.msk [vmem:[%s219] sm:$0x3] %vm224, 0.0
      $region32: #{minkowski_global_average_pooling.1} parent=27 // pred_fallthru
        _
      %v226 = vld [vmem:[%s211] sm:$0xff]
      %v227 = vld [vmem:[%s211 + $0x8] sm:$0xff]
      %v228 = vld [vmem:[%s211 + $0x10] sm:$0xff]
      %v229 = vld [vmem:[%s199] sm:$0xff]
      %v230 = vld [vmem:[%s199 + $0x8] sm:$0xff]
      %v231 = vld [vmem:[%s199 + $0x10] sm:$0xff]
      %s232 = sadd.s32 %s17, %s18
      %s233 = smul.u32 %s232, 24
      %v234 = vlaneseq
      %v235 = vshrl.u32 %v234, 7
      %v236 = vadd.s32 %v235, 8
      %v237 = vadd.s32 %v235, 16
      %v238 = vstv %s233
      %v239 = vadd.s32 %v235, %v238
      %v240 = vadd.s32 %v236, %v238
      %v241 = vadd.s32 %v237, %v238
      %vm242 = vcmp.lt.s32.totalorder %v239, 20
      %vm243 = vcmp.lt.s32.totalorder %v240, 20
      %vm244 = vcmp.lt.s32.totalorder %v241, 20
      %v245 = vsel %vm242, 1, 0
      %v246 = vsel %vm243, 1, 0
      %v247 = vsel %vm244, 1, 0
      %vm248 = vcmp.eq.s32.totalorder %v245, 1
      %vm249 = vcmp.eq.s32.totalorder %v246, 1
      %vm250 = vcmp.eq.s32.totalorder %v247, 1
      %v251 = vsel %vm248, %v226, 0.0
      %v252 = vsel %vm249, %v227, 0.0
      %v253 = vsel %vm250, %v228, 0.0
      %v254 = vlaneseq
      %v255 = vand.u32 %v254, 127
      %256 = vset.pattern.permute.xlu0 0
      %257 = vperm.xlu0 %256, %v229
      %v258 = vpop.permute.xlu0 %257
      %259 = vset.pattern.permute.xlu0 0
      %260 = vperm.xlu0 %259, %v230
      %v261 = vpop.permute.xlu0 %260
      %262 = vset.pattern.permute.xlu0 0
      %263 = vperm.xlu0 %262, %v231
      %v264 = vpop.permute.xlu0 %263
      %vm265 = vcmp.eq.s32.totalorder %v255, %v258
      %vm266 = vcmp.eq.s32.totalorder %v255, %v261
      %vm267 = vcmp.eq.s32.totalorder %v255, %v264
      %v268 = vsel %vm265, 1, 0
      %v269 = vsel %vm266, 1, 0
      %v270 = vsel %vm267, 1, 0
      %v271 = vcvt.s32.f32 %v268
      %v272 = vcvt.s32.f32 %v269
      %v273 = vcvt.s32.f32 %v270
      %274 = vxpose.xlu0.b32.start [1/16] %v271, 128
      %275 = vxpose.xlu0.b32.cont [2/16] %v272, 128
      %276 = vxpose.xlu0.b32.cont [3/16] %v273, 128
      %277 = vxpose.xlu0.b32.cont [4/16] 0.0, 128
      %278 = vxpose.xlu0.b32.cont [5/16] 0.0, 128
      %279 = vxpose.xlu0.b32.cont [6/16] 0.0, 128
      %280 = vxpose.xlu0.b32.cont [7/16] 0.0, 128
      %281 = vxpose.xlu0.b32.cont [8/16] 0.0, 128
      %282 = vxpose.xlu0.b32.cont [9/16] 0.0, 128
      %283 = vxpose.xlu0.b32.cont [10/16] 0.0, 128
      %284 = vxpose.xlu0.b32.cont [11/16] 0.0, 128
      %285 = vxpose.xlu0.b32.cont [12/16] 0.0, 128
      %286 = vxpose.xlu0.b32.cont [13/16] 0.0, 128
      %287 = vxpose.xlu0.b32.cont [14/16] 0.0, 128
      %288 = vxpose.xlu0.b32.cont [15/16] 0.0, 128
      %289 = vxpose.xlu0.b32.end [16/16] 0.0, 128
      %v290 = vpop.trf.xlu0
      %v291 = vpop.trf.xlu0
      %v292 = vpop.trf.xlu0
      %v293 = vpop.trf.xlu0
      %v294 = vpop.trf.xlu0
      %v295 = vpop.trf.xlu0
      %v296 = vpop.trf.xlu0
      %v297 = vpop.trf.xlu0
      %v298 = vpop.trf.xlu0
      %v299 = vpop.trf.xlu0
      %v300 = vpop.trf.xlu0
      %v301 = vpop.trf.xlu0
      %v302 = vpop.trf.xlu0
      %v303 = vpop.trf.xlu0
      %v304 = vpop.trf.xlu0
      %v305 = vpop.trf.xlu0
      %vm306 = vcmask 195584
      %v308 = vsel %vm306, %v290, 0
      %310 = vmatpush.msra.mxu0 0.0
      %311 = vmatpush.msra.mxu0 0.0
      %312 = vmatpush.msra.mxu0 0.0
      %313 = vmatpush.msra.mxu0 0.0
      %314 = vmatpush.msra.mxu0 0.0
      %315 = vmatpush.msra.mxu0 0.0
      %316 = vmatpush.msra.mxu0 0.0
      %317 = vmatpush.msra.mxu0 0.0
      %318 = vmatpush.msra.mxu0 0.0
      %319 = vmatpush.msra.mxu0 0.0
      %320 = vmatpush.msra.mxu0 0.0
      %321 = vmatpush.msra.mxu0 0.0
      %322 = vmatpush.msra.mxu0 0.0
      %323 = vmatpush.msra.mxu0 %v253
      %324 = vmatpush.msra.mxu0 %v252
      %325 = vmatpush.msra.mxu0 %v251
      %326 = vmatmul.f32.gmra.mxu0 %v308
      %v327 = vpop.f32.mrf.mxu0
      %v328 = vadd.f32 0.0, %v327
      %329 = vdwg.mxu0
      %v330 = vld [vmem:[%s219] sm:$0x3]
      %v331 = vadd.f32 %v330, %v328
      %vm332 = vcmask 25600
      %333 = vst.msk [vmem:[%s219] sm:$0x3] %vm332, %v331
      %p334 = scmp.lt.s32.totalorder %s17, 1
      %s335 = scalar_select %p334, %s17, 1
      %s336 = smul.addr %s335, 2
      %s337 = scalar_lea.vmem %s2, %s336
      // Predicated region
      $region33: #{minkowski_global_average_pooling.1} parent=27 // pred_check
        %p338 = pneg %p107
      $region34: #{minkowski_global_average_pooling.1} parent=27 // pred_check_branch
        %340 = sbr.rel (%p338) target = $region36
      $region35: #{minkowski_global_average_pooling.1} parent=27 // pred_region
        _
      $region36: #{minkowski_global_average_pooling.1} parent=27 // pred_fallthru
        _
    $region28: #{minkowski_global_average_pooling.1} parent=5 // pred_fallthru
      _
    %p341 = scmp.le.s32.totalorder 2, %s8
    // Predicated region
    $region37: #{minkowski_global_average_pooling.1} parent=5 // pred_check
      %p342 = pneg %p341
    $region38: #{minkowski_global_average_pooling.1} parent=5 // pred_check_branch
      %344 = sbr.rel (%p342) target = $region40
    $region39: #{minkowski_global_average_pooling.1} parent=5 // pred_region
      %s345 = ssub.s32 %s8, 2
      // Predicated region
      $region41: #{minkowski_global_average_pooling.1} parent=39 // pred_check
        %p346 = pneg %p113
      $region42: #{minkowski_global_average_pooling.1} parent=39 // pred_check_branch
        %348 = sbr.rel (%p346) target = $region44
      $region43: #{minkowski_global_average_pooling.1} parent=39 // pred_region
        %p349 = scmp.lt.s32.totalorder %s19, 1
        %s350 = scalar_select %p349, %s19, 1
        %s351 = smul.addr %s350, 2
        %s352 = scalar_lea.vmem %s2, %s351
      $region44: #{minkowski_global_average_pooling.1} parent=39 // pred_fallthru
        _
    $region40: #{minkowski_global_average_pooling.1} parent=5 // pred_fallthru
      _
  $region6: #{minkowski_global_average_pooling.1} parent=0 // loop_footer
    %s12 = sadd.s32 1, %s8
  $region7: #{minkowski_global_average_pooling.1} parent=0 // loop_footer_branch
    %7 = sbr.rel target = $region3
  $region8: #{minkowski_global_average_pooling.1} parent=0 // loop_exit
    _

</llo_original>
